<compile_context>
chip_gen: v6e
topology: v6e:2x2x1
jax: 0.10.0
libtpu: 0.0.40
codegen_flags: <defaults>
</compile_context>

<pallas_src>
import jax
import jax.numpy as jnp
from jax.experimental import pallas as pl
from jax.experimental.pallas import tpu as pltpu

EPS = 1e-5          # nn.BatchNorm2d default
DELTA_RANGE = 0.5   # corresponds to DELTA in the PyTorch script


# --------------------------------------------------------------------------- kernel
def rule10_bn_kernel(x_ref, w_ref, b_ref, o_ref):
    """x_ref: VMEM (N, TC, M)  with M = H*W on the lane axis
       w_ref: VMEM (TC, 1)     original BN weight (weight_scaled / delta), f32
       b_ref: VMEM (TC, 1)     BN bias, f32
       o_ref: VMEM (N, TC, M)  same dtype as x
    """
    x = x_ref[...].astype(jnp.float32)                      # (N, TC, M)
    n, _, m = x.shape
    inv_count = 1.0 / (n * m)

    # Two-pass batch statistics per channel (biased variance, like PyTorch training
    # mode). Lane reduce first -> (N, TC, 1), then reduce over the batch axis, so no
    # (TC, M)-sized reduction temporaries are materialized.
    mean = jnp.sum(jnp.sum(x, axis=2, keepdims=True), axis=0, keepdims=True) * inv_count
    d = x - mean                                            # (N, TC, M), reused below
    var = jnp.sum(jnp.sum(d * d, axis=2, keepdims=True), axis=0, keepdims=True) * inv_count
    inv_std = jax.lax.rsqrt(var + EPS)                      # (1, TC, 1)

    # rule10 fold: ((x-mean)*inv_std*(w*delta) + b - b)/delta + b == d*(w*inv_std) + b
    scale = w_ref[...] * inv_std                            # (TC,1)*(1,TC,1) -> (1,TC,1)
    o_ref[...] = (d * scale + b_ref[...]).astype(o_ref.dtype)   # lane-dense store


# --------------------------------------------------------------- tiling / VMEM logic
def _round_up(v, q):
    return -(-v // q) * q


def _sublane_granule(dtype):
    # f32 -> 8, bf16/f16 -> 16, int8/fp8 -> 32 (packed sublane tiling)
    return max(8, 32 // jnp.dtype(dtype).itemsize)


def _vmem_capacity_bytes():
    try:
        cap = int(getattr(pltpu.get_tpu_info(), "vmem_capacity_bytes", 0))
        if cap > 0:
            return cap
    except Exception:
        pass
    return 64 << 20  # conservative (v7x-sized) default if the query is unavailable


def _working_set_bytes(n, tc, m, dtype):
    """Per-step VMEM footprint with layout padding: double-buffered input + output
    blocks (input dtype) plus the f32 promotion copy and the (x - mean) temporary."""
    itemsize = jnp.dtype(dtype).itemsize
    tc_io = _round_up(tc, _sublane_granule(dtype))
    tc_f32 = _round_up(tc, 8)
    m_pad = _round_up(m, 128)
    blk_io = n * tc_io * m_pad * itemsize
    blk_f32 = n * tc_f32 * m_pad * 4
    return 4 * blk_io + 2 * blk_f32


def _pick_channel_tile(c, n, m, dtype, budget_bytes):
    """Channel tile: a multiple of the dtype sublane granule dividing C (or full C).
    Prefers >= 2 tiles (never grid=(1,) when C is splittable), an even tile count
    (balanced across v7x's 2 TensorCores), ~4 tiles while blocks stay >= ~1 MiB,
    and otherwise the largest tile that fits the VMEM budget."""
    g = _sublane_granule(dtype)
    if c < 2 * g or c % g != 0:
        # Channel axis can't be split under the TPU sublane-tiling constraint.
        # TODO(synk): N-tiled two-pass (stats then normalize) fallback for huge
        # per-channel footprints with an un-splittable channel axis.
        return c

    tiles = [t for t in range(g, c, g) if c % t == 0]       # proper divisors, mult of g
    fitting = [t for t in tiles if _working_set_bytes(n, t, m, dtype) <= budget_bytes]
    if not fitting:
        return tiles[0]                                      # best effort; vmem_limit absorbs

    even = [t for t in fitting if (c // t) % 2 == 0]
    pool = even if even else fitting

    itemsize = jnp.dtype(dtype).itemsize
    pref = [t for t in pool if (c // t) >= 4 and n * t * m * itemsize >= (1 << 20)]
    return (pref or pool)[-1]                                # largest qualifying tile


# ------------------------------------------------------------------------- wrapper
def trans_layer_rule10(x_nchw, weight_scaled, bias, delta):
    """x_nchw: (N, C, H, W). weight_scaled/bias: (C,) (weight already multiplied by
    delta, mirroring the PyTorch module). delta: scalar."""
    n, c, h, width = x_nchw.shape
    m = h * width

    # Free contiguous reshape only; no transposes -> x read/written exactly once.
    x3d = x_nchw.reshape(n, c, m)
    # Fold delta on the host side: scale = (weight_scaled/delta) * inv_std exactly.
    w2d = (weight_scaled.astype(jnp.float32)
           / jnp.asarray(delta, jnp.float32)).reshape(c, 1)
    b2d = bias.astype(jnp.float32).reshape(c, 1)

    cap = _vmem_capacity_bytes()
    budget = min(max(cap // 4, 8 << 20), 28 << 20)           # ~16 MiB v7x, ~28 MiB v5e/v6e
    tc = _pick_channel_tile(c, n, m, x_nchw.dtype, budget)
    grid = (c // tc,)

    ws = _working_set_bytes(n, tc, m, x_nchw.dtype)
    params = 4 * 4 * _round_up(tc, 8) * 128                  # w/b tiles, double-buffered, padded
    vmem_limit = int(min(max(ws + params + (2 << 20), 16 << 20), (cap * 3) // 4))

    out3d = pl.pallas_call(
        rule10_bn_kernel,
        out_shape=jax.ShapeDtypeStruct((n, c, m), x_nchw.dtype),
        grid=grid,
        in_specs=[
            pl.BlockSpec((n, tc, m), lambda ci: (0, ci, 0)),  # x channel tile
            pl.BlockSpec((tc, 1), lambda ci: (ci, 0)),        # weight/delta tile
            pl.BlockSpec((tc, 1), lambda ci: (ci, 0)),        # bias tile
        ],
        out_specs=pl.BlockSpec((n, tc, m), lambda ci: (0, ci, 0)),
        input_output_aliases={0: 0},                          # in-place over disjoint tiles
        compiler_params=pltpu.CompilerParams(
            dimension_semantics=("parallel",),                # channel tiles independent
            vmem_limit_bytes=vmem_limit,
        ),
    )(x3d, w2d, b2d)

    return out3d.reshape(n, c, h, width)


# ----------------------------------------------------------------------- reference
def reference(x_nchw, weight_scaled, bias, delta):
    """Pure-JAX reference mirroring the PyTorch forward (not the folded form)."""
    mean = jnp.mean(x_nchw, axis=(0, 2, 3), keepdims=True)
    var = jnp.mean((x_nchw - mean) ** 2, axis=(0, 2, 3), keepdims=True)
    gamma = weight_scaled.reshape(1, -1, 1, 1)
    beta = bias.reshape(1, -1, 1, 1)
    y = (x_nchw - mean) * jax.lax.rsqrt(var + EPS) * gamma + beta
    return (y - beta) / delta + beta


# --------------------------------------------------------------------------- main
if __name__ == "__main__":
    key = jax.random.PRNGKey(0)
    k_x, k_w, k_b, k_d, k_x2, k_w2, k_b2 = jax.random.split(key, 7)

    run = jax.jit(trans_layer_rule10)

    # --- test 1: module-sized f32 input (N=2, C=4, H=W=16; C un-splittable -> 1 tile) ---
    N, C, H, W = 2, 4, 16, 16
    x = jax.random.normal(k_x, (N, C, H, W), dtype=jnp.float32)
    weight = 1.0 + 0.1 * jax.random.normal(k_w, (C,), dtype=jnp.float32)
    bias = 0.1 * jax.random.normal(k_b, (C,), dtype=jnp.float32)
    delta = 1.0 + DELTA_RANGE * (2.0 * jax.random.uniform(k_d, (), dtype=jnp.float32) - 1.0)
    weight_scaled = weight * delta          # mirrors nn.Parameter(weight * delta)

    ref = reference(x, weight_scaled, bias, delta)          # before kernel (alias-safe)
    out = jax.block_until_ready(run(x, weight_scaled, bias, delta))
    assert out.shape == (N, C, H, W)
    assert jnp.max(jnp.abs(out - ref)) < 1e-4, "f32 mismatch vs reference"

    # --- test 2: tiled path + bf16 input (C=64 -> multiple channel tiles) ---
    N2, C2, H2, W2 = 2, 64, 16, 16
    x2 = jax.random.normal(k_x2, (N2, C2, H2, W2), dtype=jnp.bfloat16)
    w2 = 1.0 + 0.1 * jax.random.normal(k_w2, (C2,), dtype=jnp.float32)
    b2 = 0.1 * jax.random.normal(k_b2, (C2,), dtype=jnp.float32)
    ws2 = w2 * delta

    ref2 = reference(x2.astype(jnp.float32), ws2, b2, delta)
    out2 = jax.block_until_ready(run(x2, ws2, b2, delta))
    assert out2.shape == (N2, C2, H2, W2) and out2.dtype == jnp.bfloat16
    assert jnp.max(jnp.abs(out2.astype(jnp.float32) - ref2)) < 5e-2, "bf16 mismatch vs reference"

    print("KERNEL_OK")
</pallas_src>

<mosaic_0001>
module attributes {stable_mosaic.version = 11 : i64} {
  func.func @rule10_bn_kernel(%arg0: i32, %arg1: memref<2x4x256xf32, #tpu.memory_space<vmem>>, %arg2: memref<4x1xf32, #tpu.memory_space<vmem>>, %arg3: memref<4x1xf32, #tpu.memory_space<vmem>>, %arg4: memref<2x4x256xf32, #tpu.memory_space<vmem>>) attributes {dimension_semantics = [#tpu.dimension_semantics<parallel>], iteration_bounds = array<i64: 1>, scalar_prefetch = 0 : i64, scratch_operands = 0 : i64, tpu.core_type = #tpu.core_type<tc>, window_params = [{transform_indices = @transform_0, window_bounds = array<i64: 2, 4, 256>}, {transform_indices = @transform_1, window_bounds = array<i64: 4, 1>}, {transform_indices = @transform_2, window_bounds = array<i64: 4, 1>}, {transform_indices = @transform_3, window_bounds = array<i64: 2, 4, 256>}]} {
    %c0 = arith.constant 0 : index
    %c0_0 = arith.constant 0 : index
    %c0_1 = arith.constant 0 : index
    %0 = vector.load %arg1[%c0, %c0_0, %c0_1] : memref<2x4x256xf32, #tpu.memory_space<vmem>>, vector<2x4x256xf32>
    %cst = arith.constant dense<0.000000e+00> : vector<2x4xf32>
    %1 = vector.multi_reduction <add>, %0, %cst [2] : vector<2x4x256xf32> to vector<2x4xf32>
    %2 = vector.shape_cast %1 : vector<2x4xf32> to vector<2x4x1xf32>
    %cst_2 = arith.constant dense<0.000000e+00> : vector<4x1xf32>
    %3 = vector.multi_reduction <add>, %2, %cst_2 [0] : vector<2x4x1xf32> to vector<4x1xf32>
    %4 = vector.shape_cast %3 : vector<4x1xf32> to vector<1x4x1xf32>
    %cst_3 = arith.constant 0.001953125 : f32
    %5 = vector.broadcast %cst_3 : f32 to vector<1x4x1xf32>
    %6 = arith.mulf %4, %5 : vector<1x4x1xf32>
    %7 = vector.broadcast %6 : vector<1x4x1xf32> to vector<2x4x256xf32>
    %8 = arith.subf %0, %7 : vector<2x4x256xf32>
    %9 = arith.mulf %8, %8 : vector<2x4x256xf32>
    %cst_4 = arith.constant dense<0.000000e+00> : vector<2x4xf32>
    %10 = vector.multi_reduction <add>, %9, %cst_4 [2] : vector<2x4x256xf32> to vector<2x4xf32>
    %11 = vector.shape_cast %10 : vector<2x4xf32> to vector<2x4x1xf32>
    %cst_5 = arith.constant dense<0.000000e+00> : vector<4x1xf32>
    %12 = vector.multi_reduction <add>, %11, %cst_5 [0] : vector<2x4x1xf32> to vector<4x1xf32>
    %13 = vector.shape_cast %12 : vector<4x1xf32> to vector<1x4x1xf32>
    %cst_6 = arith.constant 0.001953125 : f32
    %14 = vector.broadcast %cst_6 : f32 to vector<1x4x1xf32>
    %15 = arith.mulf %13, %14 : vector<1x4x1xf32>
    %cst_7 = arith.constant 9.99999974E-6 : f32
    %16 = vector.broadcast %cst_7 : f32 to vector<1x4x1xf32>
    %17 = arith.addf %15, %16 : vector<1x4x1xf32>
    %18 = math.rsqrt %17 : vector<1x4x1xf32>
    %c0_8 = arith.constant 0 : index
    %c0_9 = arith.constant 0 : index
    %19 = vector.load %arg2[%c0_8, %c0_9] : memref<4x1xf32, #tpu.memory_space<vmem>>, vector<4x1xf32>
    %20 = vector.shape_cast %19 : vector<4x1xf32> to vector<1x4x1xf32>
    %21 = arith.mulf %20, %18 : vector<1x4x1xf32>
    %22 = vector.broadcast %21 : vector<1x4x1xf32> to vector<2x4x256xf32>
    %23 = arith.mulf %8, %22 : vector<2x4x256xf32>
    %c0_10 = arith.constant 0 : index
    %c0_11 = arith.constant 0 : index
    %24 = vector.load %arg3[%c0_10, %c0_11] : memref<4x1xf32, #tpu.memory_space<vmem>>, vector<4x1xf32>
    %25 = vector.shape_cast %24 : vector<4x1xf32> to vector<1x4x1xf32>
    %26 = vector.broadcast %25 : vector<1x4x1xf32> to vector<2x4x256xf32>
    %27 = arith.addf %23, %26 : vector<2x4x256xf32>
    %c0_12 = arith.constant 0 : index
    %c0_13 = arith.constant 0 : index
    %c0_14 = arith.constant 0 : index
    %28 = vector.load %arg4[%c0_12, %c0_13, %c0_14] : memref<2x4x256xf32, #tpu.memory_space<vmem>>, vector<2x4x256xf32>
    tpu.vector_store %arg4[%c0_12, %c0_13, %c0_14], %27 {strides = array<i32>} : memref<2x4x256xf32, #tpu.memory_space<vmem>>, vector<2x4x256xf32>,
    return
  }
  func.func @transform_0(%arg0: i32) -> (i32, i32, i32) {
    %c0_i32 = arith.constant 0 : i32
    %c0_i32_0 = arith.constant 0 : i32
    %c0_i32_1 = arith.constant 0 : i32
    return %c0_i32, %arg0, %c0_i32_0 : i32, i32, i32
  }
  func.func @transform_1(%arg0: i32) -> (i32, i32) {
    %c0_i32 = arith.constant 0 : i32
    %c0_i32_0 = arith.constant 0 : i32
    return %arg0, %c0_i32 : i32, i32
  }
  func.func @transform_2(%arg0: i32) -> (i32, i32) {
    %c0_i32 = arith.constant 0 : i32
    %c0_i32_0 = arith.constant 0 : i32
    return %arg0, %c0_i32 : i32, i32
  }
  func.func @transform_3(%arg0: i32) -> (i32, i32, i32) {
    %c0_i32 = arith.constant 0 : i32
    %c0_i32_0 = arith.constant 0 : i32
    %c0_i32_1 = arith.constant 0 : i32
    return %c0_i32, %arg0, %c0_i32_0 : i32, i32, i32
  }
}

</mosaic_0001>

<llo_original>
// kernel: trans_layer_rule10.1
$region0: #{trans_layer_rule10.1}
  #allocation0 [shape = 'u32[]', space=smem, size = 0x4, offset = 0x4, fixed_abs, tag = 'smem constant byte address 0x4 - core index']
  #allocation1 [shape = 'u32[144,128]{1,0:T(1,128)}', space=vmem, size = 0x12000, scoped, tag = 'internal scratch']
  %s0 = inlined_call_operand.vmem [shape: f32[2,4,256], index: 0, kind: input, shape index: {}, may-alias: {0,3}]
  %s1 = inlined_call_operand.vmem [shape: f32[4,1], index: 1, kind: input, shape index: {}]
  %s2 = inlined_call_operand.vmem [shape: f32[4,1], index: 2, kind: input, shape index: {}]
  %s3 = inlined_call_operand.vmem [shape: f32[2,4,256], index: 3, kind: output, shape index: {}, may-alias: {0,3}]
  %s4 = sld [smem:[#allocation0]]
  $region22: #{trans_layer_rule10.1} parent=0
    _
  %s6 = ssub.s32 1, %s4
  %s7 = scalar_select 0, %s6, %s4
  // Predicated region
  $region2: #{trans_layer_rule10.1} parent=0 // pred_check
    _
  $region3: #{trans_layer_rule10.1} parent=0 // pred_check_branch
    %9 = sbr.rel (0) target = $region5
  $region4: #{trans_layer_rule10.1} parent=0 // pred_region
    _
  $region5: #{trans_layer_rule10.1} parent=0 // pred_fallthru
    _
  // Predicated region
  $region6: #{trans_layer_rule10.1} parent=0 // pred_check
    _
  $region7: #{trans_layer_rule10.1} parent=0 // pred_check_branch
    %11 = sbr.rel (0) target = $region9
  $region8: #{trans_layer_rule10.1} parent=0 // pred_region
    _
  $region9: #{trans_layer_rule10.1} parent=0 // pred_fallthru
    _
  // Predicated region
  $region10: #{trans_layer_rule10.1} parent=0 // pred_check
    _
  $region11: #{trans_layer_rule10.1} parent=0 // pred_check_branch
    %13 = sbr.rel (0) target = $region13
  $region12: #{trans_layer_rule10.1} parent=0 // pred_region
    _
  $region13: #{trans_layer_rule10.1} parent=0 // pred_fallthru
    _
  %v14 = vld [vmem:[%s0] sm:$0xff]
  %v15 = vld [vmem:[%s0 + $0x8] sm:$0xff]
  %v18 = vcombine.high %v14, %v14
  %v19 = vcombine.high %v15, %v15
  %vm22 = vcmask 1043456
  %v23 = vsel %vm22, %v14, 0.0
  %v24 = vsel %vm22, %v18, 0.0
  %v25 = vadd.f32 %v23, %v24
  %26 = vadd.xlane.f32.xlu0 %v25
  %v27 = vpop.xlane.xlu0 %26
  %v28 = vsel %vm22, %v15, 0.0
  %v29 = vsel %vm22, %v19, 0.0
  %v30 = vadd.f32 %v28, %v29
  %31 = vadd.xlane.f32.xlu0 %v30
  %v32 = vpop.xlane.xlu0 %31
  %v33 = vsel %vm22, %v27, 0.0
  %v34 = vsel %vm22, %v32, 0.0
  %v35 = vadd.f32 %v33, %v34
  %v36 = vmul.f32 %v35, 0.001953125
  %v39 = vunpack.c.l.s4 839922192
  %v40 = vunpack.c.0.s8 %v39
  %v41 = vlaneseq
  %v42 = vshrl.u32 %v41, 7
  %v43 = vsub.s32 %v40, %v42
  %v44 = vrot.slane %v36, %v43
  %v46 = vsub.f32 %v14, %v44
  %v47 = vsub.f32 %v15, %v44
  %v48 = vmul.f32 %v46, %v46
  %v49 = vmul.f32 %v47, %v47
  %v52 = vcombine.high %v48, %v48
  %v53 = vcombine.high %v49, %v49
  %v56 = vsel %vm22, %v48, 0.0
  %v57 = vsel %vm22, %v52, 0.0
  %v58 = vadd.f32 %v56, %v57
  %59 = vadd.xlane.f32.xlu0 %v58
  %v60 = vpop.xlane.xlu0 %59
  %v61 = vsel %vm22, %v49, 0.0
  %v62 = vsel %vm22, %v53, 0.0
  %v63 = vadd.f32 %v61, %v62
  %64 = vadd.xlane.f32.xlu0 %v63
  %v65 = vpop.xlane.xlu0 %64
  %v66 = vsel %vm22, %v60, 0.0
  %v67 = vsel %vm22, %v65, 0.0
  %v68 = vadd.f32 %v66, %v67
  %v69 = vmul.f32 %v68, 0.001953125
  %v70 = vadd.f32 %v69, 1e-05
  %v71 = vrsqrt.pop %v70
  %v72 = vld [vmem:[%s1] sm:$0xf]
  %v73 = vmul.f32 %v72, %v71
  %75 = vset.pattern.permute.xlu0 0
  %76 = vperm.xlu0 %75, %v73
  %v77 = vpop.permute.xlu0 %76
  %v79 = vunpack.c.l.s4 839922192
  %v80 = vunpack.c.0.s8 %v79
  %v81 = vlaneseq
  %v82 = vshrl.u32 %v81, 7
  %v83 = vsub.s32 %v80, %v82
  %v84 = vrot.slane %v77, %v83
  %v86 = vmul.f32 %v46, %v84
  %v87 = vmul.f32 %v47, %v84
  %v88 = vld [vmem:[%s2] sm:$0xf]
  %90 = vset.pattern.permute.xlu0 0
  %91 = vperm.xlu0 %90, %v88
  %v92 = vpop.permute.xlu0 %91
  %v94 = vunpack.c.l.s4 839922192
  %v95 = vunpack.c.0.s8 %v94
  %v96 = vlaneseq
  %v97 = vshrl.u32 %v96, 7
  %v98 = vsub.s32 %v95, %v97
  %v99 = vrot.slane %v92, %v98
  %v101 = vadd.f32 %v86, %v99
  %v102 = vadd.f32 %v87, %v99
  %103 = vst [vmem:[%s3] sm:$0xff] %v101
  %104 = vst [vmem:[%s3 + $0x8] sm:$0xff] %v102
  // Predicated region
  $region14: #{trans_layer_rule10.1} parent=0 // pred_check
    _
  $region15: #{trans_layer_rule10.1} parent=0 // pred_check_branch
    %106 = sbr.rel (0) target = $region17
  $region16: #{trans_layer_rule10.1} parent=0 // pred_region
    _
  $region17: #{trans_layer_rule10.1} parent=0 // pred_fallthru
    _
  // Predicated region
  $region18: #{trans_layer_rule10.1} parent=0 // pred_check
    _
  $region19: #{trans_layer_rule10.1} parent=0 // pred_check_branch
    %108 = sbr.rel (0) target = $region21
  $region20: #{trans_layer_rule10.1} parent=0 // pred_region
    _
  $region21: #{trans_layer_rule10.1} parent=0 // pred_fallthru
    _

</llo_original>
